<compile_context>
chip_gen: v7x
topology: tpu7x:2x2x1
jax: 0.10.0
libtpu: 0.0.40
codegen_flags: <defaults>
</compile_context>

<pallas_src>
import jax
import jax.numpy as jnp
import numpy as np
from jax.experimental import pallas as pl
from jax.experimental.pallas import tpu as pltpu


def _round_up(x, m):
    return (x + m - 1) // m * m


def _vmem_capacity_bytes():
    try:
        info = pltpu.get_tpu_info()
        cap = getattr(info, "vmem_capacity_bytes", None)
        if cap:
            return int(cap)
    except Exception:
        pass
    return 64 * 1024 * 1024  # conservative fallback: v7x per-TensorCore VMEM


def _vq_argmin_kernel(x_ref, emb_ref, e2_ref, idx_ref):
    """Per batch tile: nearest-codebook-row index via (-2*x@e^T + ||e||^2) argmin."""
    x = x_ref[...]                                            # (tb, Kp), f32 or bf16
    # x @ emb.T on the MXU: contract the K dims of both operands directly
    # (single resident codebook copy, no in-kernel transpose).
    xe = jax.lax.dot_general(
        x, emb_ref[...],
        dimension_numbers=(((1,), (1,)), ((), ())),
        preferred_element_type=jnp.float32)                   # (tb, Ep) f32
    # ||x||^2 is constant per row -> dropped; padded codes carry e2 = +big.
    distances = e2_ref[...] - 2.0 * xe                        # (tb, Ep) f32
    idx = jnp.argmin(distances, axis=1).astype(jnp.int32)     # first-index tie-break
    idx_ref[...] = idx[:, None]                               # (tb, 1) i32 (tiny stream)


def vector_quantizer_forward(inputs, embeddings, commitment_cost, object_classes,
                             *, distance_in_bf16=True, batch_tile=1024):
    """Forward pass of VectorQuantizer (hyp.vq_rotate=False path).

    inputs:      (B, C, D, H, W) float32, NCDHW layout
    embeddings:  (E, K) float32 codebook, K == C*D*H*W == embedding_dim
    Returns (loss, quantized, perplexity, encodings, object_classes).
    """
    input_shape = inputs.shape
    B = int(input_shape[0])
    K = int(np.prod(input_shape[1:]))
    E = int(embeddings.shape[0])
    assert int(embeddings.shape[1]) == K, "flattened channel dim must equal embedding_dim"

    # ---- padding / dtypes -------------------------------------------------
    Kp = _round_up(K, 128)
    # v6e/v7x MXUs are 256 wide; when E <= 128 the underfill is inherent so keep 128.
    Ep = _round_up(E, 256) if E > 128 else 128

    x_dtype = jnp.bfloat16 if distance_in_bf16 else jnp.float32
    x_itemsize = int(np.dtype(x_dtype).itemsize)
    row_align = 16 if distance_in_bf16 else 8   # packed-sublane granularity for bf16

    flat = inputs.reshape(B, K).astype(jnp.float32)
    emb_f32 = embeddings.astype(jnp.float32)

    # Distance-matmul codebook (possibly bf16-rounded).  ||e||^2 is computed from
    # the SAME rounded codebook so e2 and xe see identical embeddings.
    emb_mm = emb_f32.astype(x_dtype)
    e2 = jnp.sum(emb_mm.astype(jnp.float32) ** 2, axis=1)
    e2_pad = jnp.pad(e2, (0, Ep - E), constant_values=1e30)[None, :].astype(jnp.float32)
    emb_pad = jnp.pad(emb_mm, ((0, Ep - E), (0, Kp - K)))     # (Ep, Kp), zero pad rows/cols

    # ---- generation-aware batch tile & VMEM budget ------------------------
    vmem_cap = _vmem_capacity_bytes()
    emb_bytes = Ep * Kp * x_itemsize
    fixed = 2 * emb_bytes + 2 * Ep * 4 + (2 << 20)            # codebook (+buf), e2, slack
    per_row = 2 * Kp * x_itemsize + 4 * Ep * 4 + 8            # x (dbl-buf) + dist temps + idx
    budget = vmem_cap * 3 // 4                                # leave headroom under physical
    if budget > fixed:
        tb_cap = max(row_align, int((budget - fixed) // per_row))
    else:
        tb_cap = row_align
        # TODO(synk): codebook alone exceeds the VMEM budget -> tile E on a reduction
        # grid axis with a running (min, argmin) carried in scratch.

    Bp8 = _round_up(B, row_align)
    tb = int(min(batch_tile, tb_cap, Bp8))
    tb = max(row_align, (tb // row_align) * row_align)
    if tb >= Bp8:
        tb = Bp8
    Bp = _round_up(Bp8, tb)
    nb = Bp // tb

    x_pad = jnp.pad(flat.astype(x_dtype), ((0, Bp - B), (0, Kp - K)))

    est = 2 * emb_bytes + 2 * Ep * 4 + tb * per_row + (2 << 20)
    cp_kwargs = dict(dimension_semantics=("parallel",))
    if est > 24 * 1024 * 1024:
        # Clamp below the physical per-core VMEM of this generation (64 MiB on v7x).
        cp_kwargs["vmem_limit_bytes"] = int(min(est * 5 // 4, vmem_cap * 9 // 10))

    # ---- kernel: distances + argmin -> per-row code indices ----------------
    idx_pad = pl.pallas_call(
        _vq_argmin_kernel,
        grid=(nb,),
        out_shape=jax.ShapeDtypeStruct((Bp, 1), jnp.int32),
        in_specs=[
            pl.BlockSpec((tb, Kp), lambda i: (i, 0)),   # x tile (double-buffered)
            pl.BlockSpec((Ep, Kp), lambda i: (0, 0)),   # codebook: single VMEM-resident copy
            pl.BlockSpec((1, Ep), lambda i: (0, 0)),    # ||e||^2 (VMEM-resident)
        ],
        out_specs=pl.BlockSpec((tb, 1), lambda i: (i, 0)),
        compiler_params=pltpu.CompilerParams(**cp_kwargs),
    )(x_pad, emb_pad, e2_pad)

    idx = idx_pad[:B, 0]

    # ---- cheap wrapper-side epilogue (O(B*E) / O(B*K) elementwise) ----------
    # Bit-exact row gather of the f32 codebook (replaces the old one-hot matmul).
    # TODO(synk): for an all-in-kernel variant, gather rows from the resident
    # codebook ref instead of emitting indices.
    quantized = jnp.take(emb_f32, idx, axis=0).reshape(input_shape)
    encodings = jax.nn.one_hot(idx, E, dtype=jnp.float32)

    diff = quantized - inputs.astype(jnp.float32)
    mse = jnp.mean(diff * diff)
    # Forward value: q_latent_loss == e_latent_loss == MSE(quantized, inputs).
    loss = (1.0 + commitment_cost) * mse
    # TODO(synk): training semantics (stop_gradient split of the two MSE terms and the
    # straight-through estimator quantized = x + sg(q - x)) are not modeled; forward
    # values match the PyTorch module.
    avg_probs = jnp.mean(encodings, axis=0)
    perplexity = jnp.exp(-jnp.sum(avg_probs * jnp.log(avg_probs + 1e-10)))

    return loss, quantized, perplexity, encodings, object_classes


def _reference(inputs, embeddings, commitment_cost):
    """Pure-JAX f32 reference (torch formula)."""
    B = inputs.shape[0]
    K = int(np.prod(inputs.shape[1:]))
    E = embeddings.shape[0]
    flat = inputs.reshape(B, K)
    dist = (jnp.sum(flat ** 2, axis=1, keepdims=True)
            + jnp.sum(embeddings ** 2, axis=1)
            - 2.0 * flat @ embeddings.T)
    idx = jnp.argmin(dist, axis=1)
    enc = jax.nn.one_hot(idx, E, dtype=jnp.float32)
    q = (enc @ embeddings).reshape(inputs.shape)
    mse = jnp.mean((q - inputs) ** 2)
    loss = (1.0 + commitment_cost) * mse
    avg = jnp.mean(enc, axis=0)
    perp = jnp.exp(-jnp.sum(avg * jnp.log(avg + 1e-10)))
    return loss, q, perp, enc, dist


if __name__ == "__main__":
    # Small, tile-friendly shapes consistent with the module:
    #   B=8 objects, C=4, D=H=W=4 -> embedding_dim = 4*4*4*4 = 256
    #   num_embeddings E = 128, commitment_cost = 0.25
    B, C, D, H, W = 8, 4, 4, 4, 4
    K = C * D * H * W
    E = 128
    commitment_cost = 0.25

    key = jax.random.PRNGKey(0)
    k_in, k_emb, k_cls = jax.random.split(key, 3)
    inputs = jax.random.normal(k_in, (B, C, D, H, W), dtype=jnp.float32)
    embeddings = jax.random.normal(k_emb, (E, K), dtype=jnp.float32)  # synthetic codebook
    object_classes = jax.random.randint(k_cls, (B,), 0, 5, dtype=jnp.int32)

    # ---- check 1: f32 distance path, bit-parity with the torch formula ----
    loss, quantized, perplexity, encodings, oc = jax.block_until_ready(
        vector_quantizer_forward(inputs, embeddings, commitment_cost, object_classes,
                                 distance_in_bf16=False))
    loss_ref, q_ref, perp_ref, enc_ref, dist_ref = _reference(inputs, embeddings, commitment_cost)
    np.testing.assert_allclose(np.asarray(encodings), np.asarray(enc_ref), rtol=0, atol=0)
    np.testing.assert_allclose(np.asarray(quantized), np.asarray(q_ref), rtol=1e-5, atol=1e-5)
    np.testing.assert_allclose(float(loss), float(loss_ref), rtol=1e-5, atol=1e-6)
    np.testing.assert_allclose(float(perplexity), float(perp_ref), rtol=1e-5, atol=1e-6)

    # ---- check 2: default bf16-distance path (near-ties may flip; lookup exact) ----
    loss_b, q_b, perp_b, enc_b, _ = jax.block_until_ready(
        vector_quantizer_forward(inputs, embeddings, commitment_cost, object_classes))
    np.testing.assert_allclose(np.asarray(jnp.sum(enc_b, axis=1)), np.ones(B), rtol=0, atol=0)
    idx_b = np.asarray(jnp.argmax(enc_b, axis=1))
    d_np = np.asarray(dist_ref)
    chosen = d_np[np.arange(B), idx_b]
    best = d_np.min(axis=1)
    assert np.all(chosen <= best + 0.05 * np.abs(best) + 4.0), (chosen, best)
    np.testing.assert_allclose(np.asarray(q_b).reshape(B, K),
                               np.asarray(embeddings)[idx_b], rtol=0, atol=0)
    assert np.isfinite(float(loss_b)) and np.isfinite(float(perp_b))

    # ---- check 3: non-aligned shapes exercise the padding paths ----
    B2, C2, D2, H2, W2 = 5, 3, 2, 3, 5     # K2 = 90 (pads to 128)
    E2 = 100                               # pads to 128
    k1, k2, k3 = jax.random.split(jax.random.PRNGKey(1), 3)
    inputs2 = jax.random.normal(k1, (B2, C2, D2, H2, W2), dtype=jnp.float32)
    embeddings2 = jax.random.normal(k2, (E2, C2 * D2 * H2 * W2), dtype=jnp.float32)
    oc2 = jax.random.randint(k3, (B2,), 0, 5, dtype=jnp.int32)
    l2, q2, p2, e2_, _ = jax.block_until_ready(
        vector_quantizer_forward(inputs2, embeddings2, commitment_cost, oc2,
                                 distance_in_bf16=False))
    l2r, q2r, p2r, e2r, _ = _reference(inputs2, embeddings2, commitment_cost)
    np.testing.assert_allclose(np.asarray(e2_), np.asarray(e2r), rtol=0, atol=0)
    np.testing.assert_allclose(np.asarray(q2), np.asarray(q2r), rtol=1e-5, atol=1e-5)
    np.testing.assert_allclose(float(l2), float(l2r), rtol=1e-5, atol=1e-6)
    np.testing.assert_allclose(float(p2), float(p2r), rtol=1e-5, atol=1e-6)

    # TODO(synk): hyp.vq_rotate / throw_away / filter_boxes / from_sup branches depend on
    # external `hyp` config and rotation helpers; only the standard VQ path is implemented.
    print("KERNEL_OK")
</pallas_src>

<mosaic_0001>
module attributes {stable_mosaic.version = 11 : i64} {
  func.func @_vq_argmin_kernel(%arg0: i32, %arg1: memref<8x256xf32, #tpu.memory_space<vmem>>, %arg2: memref<128x256xf32, #tpu.memory_space<vmem>>, %arg3: memref<1x128xf32, #tpu.memory_space<vmem>>, %arg4: memref<8x1xi32, #tpu.memory_space<vmem>>) attributes {dimension_semantics = [#tpu.dimension_semantics<parallel>], iteration_bounds = array<i64: 1>, scalar_prefetch = 0 : i64, scratch_operands = 0 : i64, tpu.core_type = #tpu.core_type<tc>, window_params = [{transform_indices = @transform_0, window_bounds = array<i64: 8, 256>}, {pipeline_mode = #tpu.pipeline_mode<synchronous>, transform_indices = @transform_1, window_bounds = array<i64: 128, 256>}, {pipeline_mode = #tpu.pipeline_mode<synchronous>, transform_indices = @transform_2, window_bounds = array<i64: 1, 128>}, {transform_indices = @transform_3, window_bounds = array<i64: 8, 1>}]} {
    %c0 = arith.constant 0 : index
    %c0_0 = arith.constant 0 : index
    %0 = vector.load %arg1[%c0, %c0_0] : memref<8x256xf32, #tpu.memory_space<vmem>>, vector<8x256xf32>
    %c0_1 = arith.constant 0 : index
    %c0_2 = arith.constant 0 : index
    %1 = vector.load %arg2[%c0_1, %c0_2] : memref<128x256xf32, #tpu.memory_space<vmem>>, vector<128x256xf32>
    %cst = arith.constant dense<0.000000e+00> : vector<8x128xf32>
    %2 = tpu.matmul %0, %1, %cst {dimension_numbers = #tpu.dot_dimension_numbers<[1], [1], [0], [0], [0, 0, 1, 0], [], []>} : vector<8x256xf32>, vector<128x256xf32>, vector<8x128xf32> -> vector<8x128xf32>
    %c0_3 = arith.constant 0 : index
    %c0_4 = arith.constant 0 : index
    %3 = vector.load %arg3[%c0_3, %c0_4] : memref<1x128xf32, #tpu.memory_space<vmem>>, vector<1x128xf32>
    %cst_5 = arith.constant 2.000000e+00 : f32
    %4 = vector.broadcast %cst_5 : f32 to vector<8x128xf32>
    %5 = arith.mulf %4, %2 : vector<8x128xf32>
    %6 = vector.broadcast %3 : vector<1x128xf32> to vector<8x128xf32>
    %7 = arith.subf %6, %5 : vector<8x128xf32>
    %8 = tpu.reduce_index %7 {axis = 1 : i32, kind = #tpu.reduction_kind<arg_min>} : vector<8x128xf32> -> vector<8xi32>
    %9 = vector.shape_cast %8 : vector<8xi32> to vector<8x1xi32>
    %c0_6 = arith.constant 0 : index
    %c0_7 = arith.constant 0 : index
    %10 = vector.load %arg4[%c0_6, %c0_7] : memref<8x1xi32, #tpu.memory_space<vmem>>, vector<8x1xi32>
    tpu.vector_store %arg4[%c0_6, %c0_7], %9 {strides = array<i32>} : memref<8x1xi32, #tpu.memory_space<vmem>>, vector<8x1xi32>,
    return
  }
  func.func @transform_0(%arg0: i32) -> (i32, i32) {
    %c0_i32 = arith.constant 0 : i32
    %c0_i32_0 = arith.constant 0 : i32
    return %arg0, %c0_i32 : i32, i32
  }
  func.func @transform_1(%arg0: i32) -> (i32, i32) {
    %c0_i32 = arith.constant 0 : i32
    %c0_i32_0 = arith.constant 0 : i32
    %c0_i32_1 = arith.constant 0 : i32
    return %c0_i32, %c0_i32_0 : i32, i32
  }
  func.func @transform_2(%arg0: i32) -> (i32, i32) {
    %c0_i32 = arith.constant 0 : i32
    %c0_i32_0 = arith.constant 0 : i32
    %c0_i32_1 = arith.constant 0 : i32
    return %c0_i32, %c0_i32_0 : i32, i32
  }
  func.func @transform_3(%arg0: i32) -> (i32, i32) {
    %c0_i32 = arith.constant 0 : i32
    %c0_i32_0 = arith.constant 0 : i32
    return %arg0, %c0_i32 : i32, i32
  }
}

</mosaic_0001>

<llo_original>
// kernel: tpu_custom_call.1
$region0: #{tpu_custom_call.1}
  #allocation0 [shape = 'u32[]', space=smem, size = 0x4, offset = 0x4, fixed_abs, tag = 'smem constant byte address 0x4 - core index']
  #allocation1 [shape = 'u32[144,128]{1,0:T(1,128)}', space=vmem, size = 0x12000, scoped, tag = 'internal scratch']
  %s0 = inlined_call_operand.hbm [shape: f32[8,256], index: 0, kind: input, shape index: {}]
  %s1 = inlined_call_operand.hbm [shape: f32[128,256], index: 1, kind: input, shape index: {}]
  %s2 = inlined_call_operand.vmem [shape: f32[1,128], index: 2, kind: input, shape index: {}]
  %s3 = inlined_call_operand.vmem [shape: s32[8,1], index: 3, kind: output, shape index: {}]
  %s4 = sld [smem:[#allocation0]]
  $region30: #{tpu_custom_call.1} parent=0
    _
  %s6 = ssub.s32 1, %s4
  %s7 = scalar_select 0, %s6, %s4
  $region1: #{tpu_custom_call.1} parent=0
    #allocation2 [shape = 'u8[8192]{0}', space=vmem, size = 0x2000, scoped, tag = 'input window, operand 0, single buffered']
    #allocation3 [shape = 's32[1]{0}', space=sflag, size = 0x4, scoped, tag = 'scoped memory for tpu_custom_call.1']
    #allocation4 [shape = 'u8[131072]{0}', space=vmem, size = 0x20000, scoped, tag = 'input window, operand 1, single buffered']
    #allocation5 [shape = 's32[1]{0}', space=sflag, size = 0x4, scoped, tag = 'scoped memory for tpu_custom_call.1']
    %8 = vsyncpa [#allocation3], 0
    %9 = vsyncpa [#allocation5], 0
    // Predicated region
    $region2: #{tpu_custom_call.1} parent=1 // pred_check
      _
    $region3: #{tpu_custom_call.1} parent=1 // pred_check_branch
      %11 = sbr.rel (0) target = $region5
    $region4: #{tpu_custom_call.1} parent=1 // pred_region
      %s13 = ssub.s32 256, 256
      %14 = vsyncadd [#allocation3], %s13
      %s16 = sshll.u32 [#allocation2], 4
      %s17 = int_to_ptr.vmem [resolvable:$true] %s16
      %19 = dma.hbm_to_vmem [thread:$0]  %s0, 256, %s17, [#allocation3]
    $region5: #{tpu_custom_call.1} parent=1 // pred_fallthru
      _
    // Predicated region
    $region6: #{tpu_custom_call.1} parent=1 // pred_check
      _
    $region7: #{tpu_custom_call.1} parent=1 // pred_check_branch
      %21 = sbr.rel (0) target = $region9
    $region8: #{tpu_custom_call.1} parent=1 // pred_region
      %s23 = ssub.s32 4096, 4096
      %24 = vsyncadd [#allocation5], %s23
      %s25 = sshll.u32 [#allocation4], 4
      %s26 = int_to_ptr.vmem [resolvable:$true] %s25
      %31 = dma.hbm_to_vmem [thread:$0]  %s1, 4096, %s26, [#allocation5], 256, 256, 16
    $region9: #{tpu_custom_call.1} parent=1 // pred_fallthru
      _
    // Predicated region
    $region10: #{tpu_custom_call.1} parent=1 // pred_check
      _
    $region11: #{tpu_custom_call.1} parent=1 // pred_check_branch
      %33 = sbr.rel (0) target = $region13
    $region12: #{tpu_custom_call.1} parent=1 // pred_region
      _
    $region13: #{tpu_custom_call.1} parent=1 // pred_fallthru
      _
    // Predicated region
    $region14: #{tpu_custom_call.1} parent=1 // pred_check
      _
    $region15: #{tpu_custom_call.1} parent=1 // pred_check_branch
      %35 = sbr.rel (0) target = $region17
    $region16: #{tpu_custom_call.1} parent=1 // pred_region
      %36 = dma.done [#allocation3], 256
    $region17: #{tpu_custom_call.1} parent=1 // pred_fallthru
      _
    // Predicated region
    $region18: #{tpu_custom_call.1} parent=1 // pred_check
      _
    $region19: #{tpu_custom_call.1} parent=1 // pred_check_branch
      %38 = sbr.rel (0) target = $region21
    $region20: #{tpu_custom_call.1} parent=1 // pred_region
      %39 = dma.done [#allocation5], 4096
    $region21: #{tpu_custom_call.1} parent=1 // pred_fallthru
      _
    %v40 = vld [vmem:[#allocation2] sm:$0xff]
    %v41 = vld [vmem:[#allocation2 + $0x8] sm:$0xff]
    %v42 = vld [vmem:[#allocation4] sm:$0xff]
    %v43 = vld [vmem:[#allocation4 + $0x8] sm:$0xff]
    %v44 = vld [vmem:[#allocation4 + $0x10] sm:$0xff]
    %v45 = vld [vmem:[#allocation4 + $0x18] sm:$0xff]
    %v46 = vld [vmem:[#allocation4 + $0x20] sm:$0xff]
    %v47 = vld [vmem:[#allocation4 + $0x28] sm:$0xff]
    %v48 = vld [vmem:[#allocation4 + $0x30] sm:$0xff]
    %v49 = vld [vmem:[#allocation4 + $0x38] sm:$0xff]
    %v50 = vld [vmem:[#allocation4 + $0x40] sm:$0xff]
    %v51 = vld [vmem:[#allocation4 + $0x48] sm:$0xff]
    %v52 = vld [vmem:[#allocation4 + $0x50] sm:$0xff]
    %v53 = vld [vmem:[#allocation4 + $0x58] sm:$0xff]
    %v54 = vld [vmem:[#allocation4 + $0x60] sm:$0xff]
    %v55 = vld [vmem:[#allocation4 + $0x68] sm:$0xff]
    %v56 = vld [vmem:[#allocation4 + $0x70] sm:$0xff]
    %v57 = vld [vmem:[#allocation4 + $0x78] sm:$0xff]
    %v58 = vld [vmem:[#allocation4 + $0x80] sm:$0xff]
    %v59 = vld [vmem:[#allocation4 + $0x88] sm:$0xff]
    %v60 = vld [vmem:[#allocation4 + $0x90] sm:$0xff]
    %v61 = vld [vmem:[#allocation4 + $0x98] sm:$0xff]
    %v62 = vld [vmem:[#allocation4 + $0xa0] sm:$0xff]
    %v63 = vld [vmem:[#allocation4 + $0xa8] sm:$0xff]
    %v64 = vld [vmem:[#allocation4 + $0xb0] sm:$0xff]
    %v65 = vld [vmem:[#allocation4 + $0xb8] sm:$0xff]
    %v66 = vld [vmem:[#allocation4 + $0xc0] sm:$0xff]
    %v67 = vld [vmem:[#allocation4 + $0xc8] sm:$0xff]
    %v68 = vld [vmem:[#allocation4 + $0xd0] sm:$0xff]
    %v69 = vld [vmem:[#allocation4 + $0xd8] sm:$0xff]
    %v70 = vld [vmem:[#allocation4 + $0xe0] sm:$0xff]
    %v71 = vld [vmem:[#allocation4 + $0xe8] sm:$0xff]
    %v72 = vld [vmem:[#allocation4 + $0xf0] sm:$0xff]
    %v73 = vld [vmem:[#allocation4 + $0xf8] sm:$0xff]
    %74 = vmatprep.subr.mxu0 %v43
    %75 = vmatpush1.xpose.msra.mxu0 %v42
    %76 = vmatprep.subr.mxu0 %v45
    %77 = vmatpush1.xpose.msra.mxu0 %v44
    %78 = vmatprep.subr.mxu0 %v47
    %79 = vmatpush1.xpose.msra.mxu0 %v46
    %80 = vmatprep.subr.mxu0 %v49
    %81 = vmatpush1.xpose.msra.mxu0 %v48
    %82 = vmatprep.subr.mxu0 %v51
    %83 = vmatpush1.xpose.msra.mxu0 %v50
    %84 = vmatprep.subr.mxu0 %v53
    %85 = vmatpush1.xpose.msra.mxu0 %v52
    %86 = vmatprep.subr.mxu0 %v55
    %87 = vmatpush1.xpose.msra.mxu0 %v54
    %88 = vmatprep.subr.mxu0 %v57
    %89 = vmatpush1.xpose.msra.mxu0 %v56
    %90 = vmatprep.subr.mxu0 %v59
    %91 = vmatpush1.xpose.msra.mxu0 %v58
    %92 = vmatprep.subr.mxu0 %v61
    %93 = vmatpush1.xpose.msra.mxu0 %v60
    %94 = vmatprep.subr.mxu0 %v63
    %95 = vmatpush1.xpose.msra.mxu0 %v62
    %96 = vmatprep.subr.mxu0 %v65
    %97 = vmatpush1.xpose.msra.mxu0 %v64
    %98 = vmatprep.subr.mxu0 %v67
    %99 = vmatpush1.xpose.msra.mxu0 %v66
    %100 = vmatprep.subr.mxu0 %v69
    %101 = vmatpush1.xpose.msra.mxu0 %v68
    %102 = vmatprep.subr.mxu0 %v71
    %103 = vmatpush1.xpose.msra.mxu0 %v70
    %104 = vmatprep.subr.mxu0 %v73
    %105 = vmatpush1.xpose.msra.mxu0 %v72
    %106 = vmatprep.subr.mxu0 0.0
    %107 = vmatpush1.xpose.msra.mxu0 0.0
    %108 = vmatprep.subr.mxu0 0.0
    %109 = vmatpush1.xpose.msra.mxu0 0.0
    %110 = vmatprep.subr.mxu0 0.0
    %111 = vmatpush1.xpose.msra.mxu0 0.0
    %112 = vmatprep.subr.mxu0 0.0
    %113 = vmatpush1.xpose.msra.mxu0 0.0
    %114 = vmatprep.subr.mxu0 0.0
    %115 = vmatpush1.xpose.msra.mxu0 0.0
    %116 = vmatprep.subr.mxu0 0.0
    %117 = vmatpush1.xpose.msra.mxu0 0.0
    %118 = vmatprep.subr.mxu0 0.0
    %119 = vmatpush1.xpose.msra.mxu0 0.0
    %120 = vmatprep.subr.mxu0 0.0
    %121 = vmatpush1.xpose.msra.mxu0 0.0
    %122 = vmatprep.subr.mxu0 0.0
    %123 = vmatpush1.xpose.msra.mxu0 0.0
    %124 = vmatprep.subr.mxu0 0.0
    %125 = vmatpush1.xpose.msra.mxu0 0.0
    %126 = vmatprep.subr.mxu0 0.0
    %127 = vmatpush1.xpose.msra.mxu0 0.0
    %128 = vmatprep.subr.mxu0 0.0
    %129 = vmatpush1.xpose.msra.mxu0 0.0
    %130 = vmatprep.subr.mxu0 0.0
    %131 = vmatpush1.xpose.msra.mxu0 0.0
    %132 = vmatprep.subr.mxu0 0.0
    %133 = vmatpush1.xpose.msra.mxu0 0.0
    %134 = vmatprep.subr.mxu0 0.0
    %135 = vmatpush1.xpose.msra.mxu0 0.0
    %136 = vmatprep.subr.mxu0 0.0
    %137 = vmatpush1.xpose.msra.mxu0 0.0
    %138 = vmatprep.mubr.f32.mxu0 %v41
    %139 = vmatmul.mubr.f32.gmra.mrb[0].mxu0 %v40
    %v140 = vpop.f32.mrb[0].mxu0
    %v141 = vadd.f32 0.0, %v140
    %v142 = vpop.f32.mrb[0].mxu0
    %143 = vdwg.mxu0
    %v144 = vld [vmem:[%s2] sm:$0x1]
    %v145 = vmul.f32 %v141, 2.0
    %v147 = vlaneseq
    %v148 = vshrl.u32 %v147, 7
    %v149 = vsub.s32 0, %v148
    %v150 = vrot.slane %v144, %v149
    %v152 = vsub.f32 %v150, %v145
    %153 = vmin.index.xlane.f32.xlu0 %v152
    %v154 = vpop.xlane.xlu0 %153
    %vm155 = vcmask 7168
    %156 = vst.msk [vmem:[%s3] sm:$0xff] %vm155, %v154
    // Predicated region
    $region22: #{tpu_custom_call.1} parent=1 // pred_check
      _
    $region23: #{tpu_custom_call.1} parent=1 // pred_check_branch
      %158 = sbr.rel (0) target = $region25
    $region24: #{tpu_custom_call.1} parent=1 // pred_region
      _
    $region25: #{tpu_custom_call.1} parent=1 // pred_fallthru
      _
    // Predicated region
    $region26: #{tpu_custom_call.1} parent=1 // pred_check
      _
    $region27: #{tpu_custom_call.1} parent=1 // pred_check_branch
      %160 = sbr.rel (0) target = $region29
    $region28: #{tpu_custom_call.1} parent=1 // pred_region
      _
    $region29: #{tpu_custom_call.1} parent=1 // pred_fallthru
      _
    %161 = vsyncpa [#allocation3], 1
    %162 = vsyncpa [#allocation5], 1

</llo_original>
